<compile_context>
chip_gen: v7x
topology: tpu7x:2x2x1
jax: 0.10.0
libtpu: 0.0.40
codegen_flags: <defaults>
</compile_context>

<pallas_src>
import jax
import jax.numpy as jnp
from jax.experimental import pallas as pl
from jax.experimental.pallas import tpu as pltpu


def _add_pos_kernel(x_ref, pos_ref, o_ref):
    # x_ref/o_ref: (TB or 1, TR, L); pos_ref: (1, TR, L) -> broadcasts over the
    # leading (batch) block dim. Pure VPU elementwise add; DMA-bound.
    o_ref[...] = x_ref[...] + pos_ref[...]


def _sublane_multiple(itemsize: int) -> int:
    # Sublane packing requirement: f32 -> 8, bf16 -> 16, int8/fp8 -> 32.
    return max(8, 32 // itemsize)


def _default_block_bytes() -> int:
    """Per-generation DMA block target. 4 MiB on v6e/v7x, 2 MiB otherwise."""
    try:
        kind = jax.devices()[0].device_kind.lower()
    except Exception:
        return 2 * 1024 * 1024
    if ("v6" in kind) or ("v7" in kind):
        return 4 * 1024 * 1024
    # v5e (16 MiB default scoped VMEM) and older chips: stay at 2 MiB so
    # 3 arrays x 2 buffers x 2 MiB = 12 MiB fits the default budget.
    return 2 * 1024 * 1024


def _pick_row_tile(R: int, rows_per_block: int, sub: int) -> int:
    """Largest row tile <= rows_per_block, multiple of `sub`, preferring a
    divisor of R (avoids a partial/masked last tile)."""
    cap = max(sub, (rows_per_block // sub) * sub)
    if cap >= R:
        return R  # full extent is always a legal block dim
    t = cap
    lo = max(sub, cap // 2)  # don't shrink the DMA below half the target
    while t >= lo:
        if R % t == 0:
            return t
        t -= sub
    return cap


def positional_embedding_1d(x, pos_embedding, *, target_block_bytes=None,
                            donate_x=False):
    """x: (B, S, D); pos_embedding: (1, S, D). Returns x + pos_embedding."""
    B, S, D = x.shape
    assert pos_embedding.shape == (1, S, D)

    if target_block_bytes is None:
        target_block_bytes = _default_block_bytes()

    # Cast pos to the activation dtype only if needed (halves its HBM traffic
    # when x is bf16; the module below caches this cast so it happens once).
    # Note: PyTorch adds in the parameter dtype; if f32-accumulate parity is
    # needed, keep pos f32 and cast the sum instead.
    pos = pos_embedding if pos_embedding.dtype == x.dtype else pos_embedding.astype(x.dtype)

    itemsize = jnp.dtype(x.dtype).itemsize
    total = S * D

    # ---- Choose a lane-dense (R, L) view of the (S, D) plane -----------------
    pad = 0
    if D % 128 == 0:
        R, L = S, D                       # natural layout already lane-dense
        x3 = x.reshape(B, R, L)
        pos3 = pos.reshape(1, R, L)
        total_view = total
    else:
        # Flatten (S, D), pad the lane axis up to a multiple of 128 if needed,
        # then fold into rows of length L (a multiple of 128). Lane-dense
        # stores are the single biggest lever; the (rare) pad costs one extra
        # pass over x in the wrapper.
        total_view = -(-total // 128) * 128
        pad = total_view - total
        L = 128
        while total_view % (2 * L) == 0 and (2 * L) * itemsize <= target_block_bytes // 8:
            L *= 2
        R = total_view // L
        x2 = x.reshape(B, total)
        pos2 = pos.reshape(1, total)
        if pad:
            # TODO(synk): fuse this pad into the producer instead of paying an
            # extra HBM pass here.
            x2 = jnp.pad(x2, ((0, 0), (0, pad)))
            pos2 = jnp.pad(pos2, ((0, 0), (0, pad)))
        x3 = x2.reshape(B, R, L)
        pos3 = pos2.reshape(1, R, L)

    # ---- Tiling: land each block near the DMA sweet spot ---------------------
    sub = _sublane_multiple(itemsize)
    row_bytes = L * itemsize
    rows_per_block = max(1, target_block_bytes // row_bytes)

    cost = pl.CostEstimate(
        flops=B * S * D,
        transcendentals=0,
        bytes_accessed=(2 * B * S * D + S * D) * itemsize,
    )

    max_block_bytes = 0
    if R <= rows_per_block:
        # Small (ViT-shaped) plane: block the BATCH axis so each grid step
        # moves ~target_block_bytes instead of one tiny plane. pos stays at
        # (1, R, L) and broadcasts inside the kernel (fetched once, revisited).
        plane_bytes = R * row_bytes
        tb = max(1, min(B, target_block_bytes // plane_bytes))
        grid = (pl.cdiv(B, tb),)
        in_specs = [
            pl.BlockSpec((tb, R, L), lambda b: (b, 0, 0)),
            pl.BlockSpec((1, R, L), lambda b: (0, 0, 0)),
        ]
        out_spec = pl.BlockSpec((tb, R, L), lambda b: (b, 0, 0))
        dims = ("parallel",)
        max_block_bytes = tb * plane_bytes
    else:
        # Large plane: tile rows (divisor-aligned when possible). Row tiles
        # lead and batch follows; every (r, b) output tile is written exactly
        # once, so both axes are legal "parallel" axes (balances v7x's 2 TCs).
        # The pos block index is constant along the batch axis -> DMA'd once
        # per row tile and revisited across all B batch steps per core.
        tr = _pick_row_tile(R, rows_per_block, sub)
        n_row_tiles = pl.cdiv(R, tr)
        grid = (n_row_tiles, B)
        in_specs = [
            pl.BlockSpec((1, tr, L), lambda r, b: (b, r, 0)),
            pl.BlockSpec((1, tr, L), lambda r, b: (0, r, 0)),
        ]
        out_spec = pl.BlockSpec((1, tr, L), lambda r, b: (b, r, 0))
        dims = ("parallel", "parallel")
        max_block_bytes = tr * row_bytes

    # 3 arrays x 2 buffers per block; raise the scoped-VMEM limit only when the
    # default (16 MiB on v5e, 32 MiB on v6e/v7x) might be tight.
    vmem_need = 6 * max_block_bytes
    vmem_limit = 48 * 1024 * 1024 if vmem_need > 12 * 1024 * 1024 else None

    # Aliasing x3 -> out is only a win if the caller actually donates x;
    # otherwise XLA inserts a defensive copy, so it is opt-in.
    io_aliases = {0: 0} if donate_x else {}

    out3 = pl.pallas_call(
        _add_pos_kernel,
        out_shape=jax.ShapeDtypeStruct((B, R, L), x.dtype),
        grid_spec=pltpu.PrefetchScalarGridSpec(
            num_scalar_prefetch=0,
            grid=grid,
            in_specs=in_specs,
            out_specs=out_spec,
        ),
        compiler_params=pltpu.CompilerParams(
            dimension_semantics=dims,
            vmem_limit_bytes=vmem_limit,
        ),
        cost_estimate=cost,
        input_output_aliases=io_aliases,
    )(x3, pos3)

    if pad:
        return out3.reshape(B, total_view)[:, :total].reshape(B, S, D)
    return out3.reshape(B, S, D)


class PositionalEmbedding1D:
    """JAX/Pallas port: adds (learned) positional embeddings to the inputs."""

    def __init__(self, seq_len, dim, dtype=jnp.float32):
        # nn.Parameter(torch.zeros(1, seq_len, dim)) -> deterministic init.
        # Use a deterministic non-zero init so the add is observable in the demo.
        key = jax.random.PRNGKey(42)
        self.pos_embedding = (
            jax.random.normal(key, (1, seq_len, dim), dtype=jnp.float32) * 0.02
        ).astype(dtype)
        self._pos_cache = {}          # dtype -> cast copy (cast exactly once)
        # jit so the wrapper reshape/pad and the pallas_call compile together
        # (no standalone cast/reshape kernels per forward).
        self._fwd = jax.jit(positional_embedding_1d)

    def _pos_as(self, dtype):
        if self.pos_embedding.dtype == dtype:
            return self.pos_embedding
        cached = self._pos_cache.get(dtype)
        if cached is None:
            cached = self.pos_embedding.astype(dtype)
            self._pos_cache[dtype] = cached
        return cached

    def __call__(self, x, mask=None):
        if mask is not None:
            # TODO(synk): data-dependent gather for the mask branch
            # (pos.expand(B,-1,-1)[mask].view(*x.shape)) is not implemented.
            raise NotImplementedError(
                "PositionalEmbedding1D: mask branch not implemented in Pallas port"
            )
        return self._fwd(x, self._pos_as(x.dtype))


if __name__ == "__main__":
    B, S, D = 2, 8, 32
    key = jax.random.PRNGKey(0)
    x = jax.random.normal(key, (B, S, D), dtype=jnp.float32)

    module = PositionalEmbedding1D(seq_len=S, dim=D)
    out = module(x)
    out = jax.block_until_ready(out)

    # Reference check in plain JAX (same semantics as the PyTorch broadcast add).
    ref = x + module.pos_embedding.astype(x.dtype)
    assert out.shape == (B, S, D)
    assert jnp.allclose(out, ref, atol=1e-6), "mismatch vs reference"

    print("KERNEL_OK")
</pallas_src>

<mosaic_0001>
module attributes {stable_mosaic.version = 11 : i64} {
  func.func @_add_pos_kernel(%arg0: i32, %arg1: memref<2x1x256xf32, #tpu.memory_space<vmem>>, %arg2: memref<1x1x256xf32, #tpu.memory_space<vmem>>, %arg3: memref<2x1x256xf32, #tpu.memory_space<vmem>>) attributes {dimension_semantics = [#tpu.dimension_semantics<parallel>], iteration_bounds = array<i64: 1>, scalar_prefetch = 0 : i64, scratch_operands = 0 : i64, tpu.core_type = #tpu.core_type<tc>, window_params = [{transform_indices = @transform_0, window_bounds = array<i64: 2, 1, 256>}, {pipeline_mode = #tpu.pipeline_mode<synchronous>, transform_indices = @transform_1, window_bounds = array<i64: 1, 1, 256>}, {transform_indices = @transform_2, window_bounds = array<i64: 2, 1, 256>}]} {
    %c0 = arith.constant 0 : index
    %c0_0 = arith.constant 0 : index
    %c0_1 = arith.constant 0 : index
    %0 = vector.load %arg1[%c0, %c0_0, %c0_1] : memref<2x1x256xf32, #tpu.memory_space<vmem>>, vector<2x1x256xf32>
    %c0_2 = arith.constant 0 : index
    %c0_3 = arith.constant 0 : index
    %c0_4 = arith.constant 0 : index
    %1 = vector.load %arg2[%c0_2, %c0_3, %c0_4] : memref<1x1x256xf32, #tpu.memory_space<vmem>>, vector<1x1x256xf32>
    %2 = vector.broadcast %1 : vector<1x1x256xf32> to vector<2x1x256xf32>
    %3 = arith.addf %0, %2 : vector<2x1x256xf32>
    %c0_5 = arith.constant 0 : index
    %c0_6 = arith.constant 0 : index
    %c0_7 = arith.constant 0 : index
    %4 = vector.load %arg3[%c0_5, %c0_6, %c0_7] : memref<2x1x256xf32, #tpu.memory_space<vmem>>, vector<2x1x256xf32>
    tpu.vector_store %arg3[%c0_5, %c0_6, %c0_7], %3 {strides = array<i32>} : memref<2x1x256xf32, #tpu.memory_space<vmem>>, vector<2x1x256xf32>,
    return
  }
  func.func @transform_0(%arg0: i32) -> (i32, i32, i32) {
    %c0_i32 = arith.constant 0 : i32
    %c0_i32_0 = arith.constant 0 : i32
    %c0_i32_1 = arith.constant 0 : i32
    return %arg0, %c0_i32, %c0_i32_0 : i32, i32, i32
  }
  func.func @transform_1(%arg0: i32) -> (i32, i32, i32) {
    %c0_i32 = arith.constant 0 : i32
    %c0_i32_0 = arith.constant 0 : i32
    %c0_i32_1 = arith.constant 0 : i32
    %c0_i32_2 = arith.constant 0 : i32
    return %c0_i32, %c0_i32_0, %c0_i32_1 : i32, i32, i32
  }
  func.func @transform_2(%arg0: i32) -> (i32, i32, i32) {
    %c0_i32 = arith.constant 0 : i32
    %c0_i32_0 = arith.constant 0 : i32
    %c0_i32_1 = arith.constant 0 : i32
    return %arg0, %c0_i32, %c0_i32_0 : i32, i32, i32
  }
}

</mosaic_0001>

<llo_original>
// kernel: positional_embedding_1d.1
$region0: #{positional_embedding_1d.1}
  #allocation0 [shape = 'u32[]', space=smem, size = 0x4, offset = 0x4, fixed_abs, tag = 'smem constant byte address 0x4 - core index']
  #allocation1 [shape = 'u32[144,128]{1,0:T(1,128)}', space=vmem, size = 0x12000, scoped, tag = 'internal scratch']
  %s0 = inlined_call_operand.vmem [shape: f32[2,1,256], index: 0, kind: input, shape index: {}]
  %s1 = inlined_call_operand.vmem [shape: f32[1,1,256], index: 1, kind: input, shape index: {}]
  %s2 = inlined_call_operand.vmem [shape: f32[2,1,256], index: 2, kind: output, shape index: {}]
  %s3 = sld [smem:[#allocation0]]
  $region18: #{positional_embedding_1d.1} parent=0
    _
  %s5 = ssub.s32 1, %s3
  %s6 = scalar_select 0, %s5, %s3
  // Predicated region
  $region2: #{positional_embedding_1d.1} parent=0 // pred_check
    _
  $region3: #{positional_embedding_1d.1} parent=0 // pred_check_branch
    %8 = sbr.rel (0) target = $region5
  $region4: #{positional_embedding_1d.1} parent=0 // pred_region
    _
  $region5: #{positional_embedding_1d.1} parent=0 // pred_fallthru
    _
  // Predicated region
  $region6: #{positional_embedding_1d.1} parent=0 // pred_check
    _
  $region7: #{positional_embedding_1d.1} parent=0 // pred_check_branch
    %10 = sbr.rel (0) target = $region9
  $region8: #{positional_embedding_1d.1} parent=0 // pred_region
    _
  $region9: #{positional_embedding_1d.1} parent=0 // pred_fallthru
    _
  %v11 = vld [vmem:[%s0] sm:$0x3]
  %v12 = vld [vmem:[%s0 + $0x2] sm:$0x3]
  %v13 = vld [vmem:[%s1] sm:$0x3]
  %v14 = vadd.f32 %v11, %v13
  %v15 = vadd.f32 %v12, %v13
  %v16 = vlaneseq
  %vm17 = vcmp.ge.s32.totalorder %v16, 0
  %vm18 = vcmp.lt.s32.totalorder %v16, 256
  %vm19 = vmand %vm17, %vm18
  %20 = vst.msk [vmem:[%s2] sm:$0x3] %vm19, %v14
  %21 = vst.msk [vmem:[%s2 + $0x2] sm:$0x3] %vm19, %v15
  // Predicated region
  $region10: #{positional_embedding_1d.1} parent=0 // pred_check
    _
  $region11: #{positional_embedding_1d.1} parent=0 // pred_check_branch
    %23 = sbr.rel (0) target = $region13
  $region12: #{positional_embedding_1d.1} parent=0 // pred_region
    _
  $region13: #{positional_embedding_1d.1} parent=0 // pred_fallthru
    _
  // Predicated region
  $region14: #{positional_embedding_1d.1} parent=0 // pred_check
    _
  $region15: #{positional_embedding_1d.1} parent=0 // pred_check_branch
    %25 = sbr.rel (0) target = $region17
  $region16: #{positional_embedding_1d.1} parent=0 // pred_region
    _
  $region17: #{positional_embedding_1d.1} parent=0 // pred_fallthru
    _

</llo_original>
